<compile_context>
chip_gen: v6e
topology: v6e:2x2x1
jax: 0.10.0
libtpu: 0.0.40
codegen_flags: <defaults>
</compile_context>

<pallas_src>
import jax
import jax.numpy as jnp
from jax import lax
from jax.experimental import pallas as pl
from jax.experimental.pallas import tpu as pltpu


def _linear_leaky_relu_kernel(slope_ref, x_ref, w_ref, b_ref, o_ref):
    # slope_ref: SMEM (1,) f32      -- nn.Parameter negative_slope (runtime)
    # x_ref: (tm, K) VMEM
    # w_ref: (N, K)  VMEM           -- PyTorch nn.Linear layout (out, in)
    # b_ref: (1, N)  VMEM
    # o_ref: (tm, N) VMEM (lane-dense, N = 128)
    y = lax.dot_general(
        x_ref[...], w_ref[...],
        dimension_numbers=(((1,), (1,)), ((), ())),   # contract on K
        preferred_element_type=jnp.float32,
    )
    y = y + b_ref[...]
    slope = slope_ref[0]
    # Exact PyTorch leaky_relu semantics (slope is a runtime parameter and may
    # lie outside [0, 1], so do NOT rewrite as jnp.maximum).
    o_ref[...] = jnp.where(y >= 0.0, y, slope * y).astype(o_ref.dtype)


def linear_leaky_relu(x, w, b, negative_slope, *, block_m=256):
    """Fused Linear + LeakyReLU.

    x: (M, K) f32
    w: (N, K) f32  -- PyTorch nn.Linear weight layout (out, in); NOT transposed.
    b: (N,)   f32
    negative_slope: scalar f32 (runtime value / nn.Parameter).
    """
    M, K = x.shape
    N, K2 = w.shape
    assert K == K2 and b.shape == (N,)

    b2d = b.reshape(1, N)
    slope = jnp.asarray(negative_slope, jnp.float32).reshape(1)   # 1-D SMEM scalar

    cost = pl.CostEstimate(
        flops=2 * M * K * N,
        bytes_accessed=4 * (M * K + N * K + N + M * N),
        transcendentals=0,
    )
    smem_spec = pl.BlockSpec(memory_space=pltpu.MemorySpace.SMEM)
    vmem_spec = pl.BlockSpec(memory_space=pltpu.MemorySpace.VMEM)

    if M <= block_m or M % block_m != 0:
        # Tiny / irregular M (the spec's 8x64 case): single gridless call,
        # full-array VMEM blocks — the op is 100% launch-overhead bound so
        # grid/pipeline machinery would only add cost.
        return pl.pallas_call(
            _linear_leaky_relu_kernel,
            out_shape=jax.ShapeDtypeStruct((M, N), jnp.float32),
            in_specs=[smem_spec, vmem_spec, vmem_spec, vmem_spec],
            out_specs=vmem_spec,
            cost_estimate=cost,
        )(slope, x, w, b2d)

    # Batched-M path: tile M over a "parallel" grid so one pallas_call covers
    # all rows (amortizes launch + DMA-pipeline setup).  Weight and bias stay
    # resident; x/out tiles stream.
    # TODO(synk): once M >= ~256, casting x/w tiles to bf16 (keeping f32
    # accumulation + f32 epilogue) is the fast MXU path on v6e/v7x.
    grid = (M // block_m,)
    return pl.pallas_call(
        _linear_leaky_relu_kernel,
        out_shape=jax.ShapeDtypeStruct((M, N), jnp.float32),
        grid=grid,
        in_specs=[
            smem_spec,                                       # slope (whole, SMEM)
            pl.BlockSpec((block_m, K), lambda i: (i, 0)),    # x tile
            pl.BlockSpec((N, K), lambda i: (0, 0)),          # w (resident)
            pl.BlockSpec((1, N), lambda i: (0, 0)),          # bias (resident)
        ],
        out_specs=pl.BlockSpec((block_m, N), lambda i: (i, 0)),
        compiler_params=pltpu.CompilerParams(dimension_semantics=("parallel",)),
        cost_estimate=cost,
    )(slope, x, w, b2d)


if __name__ == "__main__":
    key = jax.random.PRNGKey(0)
    kx, kw, kb, kx2 = jax.random.split(key, 4)

    # Shapes from the PyTorch spec: x1 = torch.randn(8, 64), Linear(64, 128).
    M, K, N = 8, 64, 128
    x = jax.random.normal(kx, (M, K), dtype=jnp.float32)

    # Deterministic Linear(64, 128) parameters in PyTorch layout: (out, in).
    bound = 1.0 / (K ** 0.5)
    w = jax.random.uniform(kw, (N, K), dtype=jnp.float32, minval=-bound, maxval=bound)
    b = jax.random.uniform(kb, (N,), dtype=jnp.float32, minval=-bound, maxval=bound)
    negative_slope = 0.01

    fn = jax.jit(linear_leaky_relu)

    # --- spec shape (gridless path) ---
    out = jax.block_until_ready(fn(x, w, b, negative_slope))
    y_ref = x @ w.T + b
    ref = jnp.where(y_ref >= 0, y_ref, negative_slope * y_ref)
    assert out.shape == (M, N)
    assert jnp.allclose(out, ref, atol=1e-5, rtol=1e-5)

    # --- batched-M shape (tiled "parallel"-grid path) ---
    Mb = 512
    xb = jax.random.normal(kx2, (Mb, K), dtype=jnp.float32)
    outb = jax.block_until_ready(fn(xb, w, b, negative_slope))
    yb_ref = xb @ w.T + b
    refb = jnp.where(yb_ref >= 0, yb_ref, negative_slope * yb_ref)
    assert outb.shape == (Mb, N)
    assert jnp.allclose(outb, refb, atol=1e-4, rtol=1e-4)

    print("KERNEL_OK")
</pallas_src>

<mosaic_0001>
module attributes {stable_mosaic.version = 11 : i64} {
  func.func @_linear_leaky_relu_kernel(%arg0: memref<1xf32, #tpu.memory_space<smem>>, %arg1: memref<8x64xf32, #tpu.memory_space<vmem>>, %arg2: memref<128x64xf32, #tpu.memory_space<vmem>>, %arg3: memref<1x128xf32, #tpu.memory_space<vmem>>, %arg4: memref<8x128xf32, #tpu.memory_space<vmem>>) attributes {dimension_semantics = [], scalar_prefetch = 0 : i64, scratch_operands = 0 : i64, tpu.core_type = #tpu.core_type<tc>} {
    %c0 = arith.constant 0 : index
    %c0_0 = arith.constant 0 : index
    %0 = vector.load %arg1[%c0, %c0_0] : memref<8x64xf32, #tpu.memory_space<vmem>>, vector<8x64xf32>
    %c0_1 = arith.constant 0 : index
    %c0_2 = arith.constant 0 : index
    %1 = vector.load %arg2[%c0_1, %c0_2] : memref<128x64xf32, #tpu.memory_space<vmem>>, vector<128x64xf32>
    %cst = arith.constant dense<0.000000e+00> : vector<8x128xf32>
    %2 = tpu.matmul %0, %1, %cst {dimension_numbers = #tpu.dot_dimension_numbers<[1], [1], [0], [0], [0, 0, 1, 0], [], []>} : vector<8x64xf32>, vector<128x64xf32>, vector<8x128xf32> -> vector<8x128xf32>
    %c0_3 = arith.constant 0 : index
    %c0_4 = arith.constant 0 : index
    %3 = vector.load %arg3[%c0_3, %c0_4] : memref<1x128xf32, #tpu.memory_space<vmem>>, vector<1x128xf32>
    %4 = vector.broadcast %3 : vector<1x128xf32> to vector<8x128xf32>
    %5 = arith.addf %2, %4 : vector<8x128xf32>
    %c0_5 = arith.constant 0 : index
    %6 = memref.load %arg0[%c0_5] : memref<1xf32, #tpu.memory_space<smem>>
    %cst_6 = arith.constant 0.000000e+00 : f32
    %7 = vector.broadcast %cst_6 : f32 to vector<8x128xf32>
    %8 = arith.cmpf oge, %5, %7 : vector<8x128xf32>
    %9 = vector.broadcast %6 : f32 to vector<8x128xf32>
    %10 = arith.mulf %9, %5 : vector<8x128xf32>
    %11 = arith.select %8, %5, %10 : vector<8x128xi1>, vector<8x128xf32>
    %c0_7 = arith.constant 0 : index
    %c0_8 = arith.constant 0 : index
    %12 = vector.load %arg4[%c0_7, %c0_8] : memref<8x128xf32, #tpu.memory_space<vmem>>, vector<8x128xf32>
    tpu.vector_store %arg4[%c0_7, %c0_8], %11 {strides = array<i32>} : memref<8x128xf32, #tpu.memory_space<vmem>>, vector<8x128xf32>,
    return
  }
}

</mosaic_0001>

<llo_original>
// kernel: linear_leaky_relu.1
$region0: #{linear_leaky_relu.1}
  #allocation0 [shape = 'u32[]', space=smem, size = 0x4, offset = 0x4, fixed_abs, tag = 'smem constant byte address 0x4 - core index']
  #allocation1 [shape = 'u32[144,128]{1,0:T(1,128)}', space=vmem, size = 0x12000, scoped, tag = 'internal scratch']
  #allocation2 [shape = 'f32[1]{0:T(128)S(6)}', space=smem, size = 0x200, scoped, tag = 'scoped memory for linear_leaky_relu.1']
  %s0 = inlined_call_operand.<no memory space> [shape: f32[1], index: 0, kind: input, shape index: {}]
  %s1 = inlined_call_operand.vmem [shape: f32[8,64], index: 1, kind: input, shape index: {}]
  %s2 = inlined_call_operand.vmem [shape: f32[128,64], index: 2, kind: input, shape index: {}]
  %s3 = inlined_call_operand.vmem [shape: f32[1,128], index: 3, kind: input, shape index: {}]
  %s4 = inlined_call_operand.hbm [shape: f32[8,128], index: 4, kind: output, shape index: {}]
  %s5 = sld [smem:[#allocation0]]
  $region26: #{linear_leaky_relu.1} parent=0
    _
  %s7 = ssub.s32 1, %s5
  %s8 = scalar_select 0, %s7, %s5
  %9 = sst [smem:[#allocation2]] %s0
  $region1: #{linear_leaky_relu.1} parent=0
    #allocation3 [shape = 'u8[4096]{0}', space=vmem, size = 0x1000, scoped, tag = 'output window, operand 0, single buffered']
    #allocation4 [shape = 's32[1]{0}', space=sflag, size = 0x4, scoped, tag = 'scoped memory for linear_leaky_relu.1']
    %10 = vsyncpa [#allocation4], 0
    // Predicated region
    $region2: #{linear_leaky_relu.1} parent=1 // pred_check
      _
    $region3: #{linear_leaky_relu.1} parent=1 // pred_check_branch
      %12 = sbr.rel (0) target = $region5
    $region4: #{linear_leaky_relu.1} parent=1 // pred_region
      _
    $region5: #{linear_leaky_relu.1} parent=1 // pred_fallthru
      _
    // Predicated region
    $region6: #{linear_leaky_relu.1} parent=1 // pred_check
      _
    $region7: #{linear_leaky_relu.1} parent=1 // pred_check_branch
      %14 = sbr.rel (0) target = $region9
    $region8: #{linear_leaky_relu.1} parent=1 // pred_region
      _
    $region9: #{linear_leaky_relu.1} parent=1 // pred_fallthru
      _
    // Predicated region
    $region10: #{linear_leaky_relu.1} parent=1 // pred_check
      _
    $region11: #{linear_leaky_relu.1} parent=1 // pred_check_branch
      %16 = sbr.rel (0) target = $region13
    $region12: #{linear_leaky_relu.1} parent=1 // pred_region
      _
    $region13: #{linear_leaky_relu.1} parent=1 // pred_fallthru
      _
    // Predicated region
    $region14: #{linear_leaky_relu.1} parent=1 // pred_check
      _
    $region15: #{linear_leaky_relu.1} parent=1 // pred_check_branch
      %18 = sbr.rel (0) target = $region17
    $region16: #{linear_leaky_relu.1} parent=1 // pred_region
      _
    $region17: #{linear_leaky_relu.1} parent=1 // pred_fallthru
      _
    %v19 = vld [vmem:[%s1] sm:$0xff]
    %v20 = vld [vmem:[%s2] sm:$0xff]
    %v21 = vld [vmem:[%s2 + $0x8] sm:$0xff]
    %v22 = vld [vmem:[%s2 + $0x10] sm:$0xff]
    %v23 = vld [vmem:[%s2 + $0x18] sm:$0xff]
    %v24 = vld [vmem:[%s2 + $0x20] sm:$0xff]
    %v25 = vld [vmem:[%s2 + $0x28] sm:$0xff]
    %v26 = vld [vmem:[%s2 + $0x30] sm:$0xff]
    %v27 = vld [vmem:[%s2 + $0x38] sm:$0xff]
    %v28 = vld [vmem:[%s2 + $0x40] sm:$0xff]
    %v29 = vld [vmem:[%s2 + $0x48] sm:$0xff]
    %v30 = vld [vmem:[%s2 + $0x50] sm:$0xff]
    %v31 = vld [vmem:[%s2 + $0x58] sm:$0xff]
    %v32 = vld [vmem:[%s2 + $0x60] sm:$0xff]
    %v33 = vld [vmem:[%s2 + $0x68] sm:$0xff]
    %v34 = vld [vmem:[%s2 + $0x70] sm:$0xff]
    %v35 = vld [vmem:[%s2 + $0x78] sm:$0xff]
    %v36 = vld [vmem:[%s3] sm:$0x1]
    %v38 = vlaneseq
    %v39 = vshrl.u32 %v38, 7
    %v40 = vsub.s32 0, %v39
    %v41 = vrot.slane %v36, %v40
    %vm43 = vcmask 523264
    %v45 = vsel %vm43, %v19, 0
    %v48 = vsel %vm43, %v20, 0
    %v51 = vsel %vm43, %v21, 0
    %v54 = vsel %vm43, %v22, 0
    %v57 = vsel %vm43, %v23, 0
    %v60 = vsel %vm43, %v24, 0
    %v63 = vsel %vm43, %v25, 0
    %v66 = vsel %vm43, %v26, 0
    %v69 = vsel %vm43, %v27, 0
    %v72 = vsel %vm43, %v28, 0
    %v75 = vsel %vm43, %v29, 0
    %v78 = vsel %vm43, %v30, 0
    %v81 = vsel %vm43, %v31, 0
    %v84 = vsel %vm43, %v32, 0
    %v87 = vsel %vm43, %v33, 0
    %v90 = vsel %vm43, %v34, 0
    %v93 = vsel %vm43, %v35, 0
    %95 = vmatprep.subr.mxu0 0.0
    %96 = vmatpush1.xpose.msra.mxu0 %v93
    %97 = vmatprep.subr.mxu0 0.0
    %98 = vmatpush1.xpose.msra.mxu0 %v90
    %99 = vmatprep.subr.mxu0 0.0
    %100 = vmatpush1.xpose.msra.mxu0 %v87
    %101 = vmatprep.subr.mxu0 0.0
    %102 = vmatpush1.xpose.msra.mxu0 %v84
    %103 = vmatprep.subr.mxu0 0.0
    %104 = vmatpush1.xpose.msra.mxu0 %v81
    %105 = vmatprep.subr.mxu0 0.0
    %106 = vmatpush1.xpose.msra.mxu0 %v78
    %107 = vmatprep.subr.mxu0 0.0
    %108 = vmatpush1.xpose.msra.mxu0 %v75
    %109 = vmatprep.subr.mxu0 0.0
    %110 = vmatpush1.xpose.msra.mxu0 %v72
    %111 = vmatprep.subr.mxu0 0.0
    %112 = vmatpush1.xpose.msra.mxu0 %v69
    %113 = vmatprep.subr.mxu0 0.0
    %114 = vmatpush1.xpose.msra.mxu0 %v66
    %115 = vmatprep.subr.mxu0 0.0
    %116 = vmatpush1.xpose.msra.mxu0 %v63
    %117 = vmatprep.subr.mxu0 0.0
    %118 = vmatpush1.xpose.msra.mxu0 %v60
    %119 = vmatprep.subr.mxu0 0.0
    %120 = vmatpush1.xpose.msra.mxu0 %v57
    %121 = vmatprep.subr.mxu0 0.0
    %122 = vmatpush1.xpose.msra.mxu0 %v54
    %123 = vmatprep.subr.mxu0 0.0
    %124 = vmatpush1.xpose.msra.mxu0 %v51
    %125 = vmatprep.subr.mxu0 0.0
    %126 = vmatpush1.xpose.msra.mxu0 %v48
    %127 = vmatprep.subr.mxu0 0.0
    %128 = vmatpush2.xpose.msra.mxu0 0.0
    %129 = vmatprep.subr.mxu0 0.0
    %130 = vmatpush2.xpose.msra.mxu0 0.0
    %131 = vmatprep.subr.mxu0 0.0
    %132 = vmatpush2.xpose.msra.mxu0 0.0
    %133 = vmatprep.subr.mxu0 0.0
    %134 = vmatpush2.xpose.msra.mxu0 0.0
    %135 = vmatprep.subr.mxu0 0.0
    %136 = vmatpush2.xpose.msra.mxu0 0.0
    %137 = vmatprep.subr.mxu0 0.0
    %138 = vmatpush2.xpose.msra.mxu0 0.0
    %139 = vmatprep.subr.mxu0 0.0
    %140 = vmatpush2.xpose.msra.mxu0 0.0
    %141 = vmatprep.subr.mxu0 0.0
    %142 = vmatpush2.xpose.msra.mxu0 0.0
    %143 = vmatprep.subr.mxu0 0.0
    %144 = vmatpush2.xpose.msra.mxu0 0.0
    %145 = vmatprep.subr.mxu0 0.0
    %146 = vmatpush2.xpose.msra.mxu0 0.0
    %147 = vmatprep.subr.mxu0 0.0
    %148 = vmatpush2.xpose.msra.mxu0 0.0
    %149 = vmatprep.subr.mxu0 0.0
    %150 = vmatpush2.xpose.msra.mxu0 0.0
    %151 = vmatprep.subr.mxu0 0.0
    %152 = vmatpush2.xpose.msra.mxu0 0.0
    %153 = vmatprep.subr.mxu0 0.0
    %154 = vmatpush2.xpose.msra.mxu0 0.0
    %155 = vmatprep.subr.mxu0 0.0
    %156 = vmatpush2.xpose.msra.mxu0 0.0
    %157 = vmatprep.subr.mxu0 0.0
    %158 = vmatpush2.xpose.msra.mxu0 0.0
    %159 = vmatprep.mubr.f32.mxu0 0.0
    %160 = vmatmul.mubr.f32.gmra.mxu0 %v45
    %v161 = vpop.f32.mrf.mxu0
    %v162 = vadd.f32 %v41, %v161
    %v163 = vpop.f32.mrf.mxu0
    %164 = vdwg.mxu0
    %s165 = sld [smem:[#allocation2]]
    %vm166 = vcmp.ge.f32.partialorder %v162, 0.0
    %v167 = vstv %s165
    %v168 = vmul.f32 %v167, %v162
    %v169 = vsel %vm166, %v162, %v168
    %170 = vst [vmem:[#allocation3] sm:$0xff] %v169
    // Predicated region
    $region18: #{linear_leaky_relu.1} parent=1 // pred_check
      _
    $region19: #{linear_leaky_relu.1} parent=1 // pred_check_branch
      %172 = sbr.rel (0) target = $region21
    $region20: #{linear_leaky_relu.1} parent=1 // pred_region
      %s174 = ssub.s32 128, 128
      %175 = vsyncadd [#allocation4], %s174
      %s177 = sshll.u32 [#allocation3], 4
      %s178 = int_to_ptr.vmem [resolvable:$true] %s177
      %180 = dma.vmem_to_hbm [thread:$0]  %s178, 128, %s4, [#allocation4]
    $region21: #{linear_leaky_relu.1} parent=1 // pred_fallthru
      _
    // Predicated region
    $region22: #{linear_leaky_relu.1} parent=1 // pred_check
      _
    $region23: #{linear_leaky_relu.1} parent=1 // pred_check_branch
      %182 = sbr.rel (0) target = $region25
    $region24: #{linear_leaky_relu.1} parent=1 // pred_region
      %183 = dma.done [#allocation4], 128
    $region25: #{linear_leaky_relu.1} parent=1 // pred_fallthru
      _
    %184 = vsyncpa [#allocation4], 1

</llo_original>
